<compile_context>
chip_gen: v6e
topology: v6e:2x2x1
jax: 0.10.0
libtpu: 0.0.40
codegen_flags: <defaults>
</compile_context>

<pallas_src>
import jax
import jax.numpy as jnp
from jax.experimental import pallas as pl
from jax.experimental.pallas import tpu as pltpu

NUM_TERMS = 5
LANE = 128              # lane width (pixels per sublane row)
MAX_BLOCK_ROWS = 1024   # cap: ~2.5 MiB/step, ~5 MiB double-buffered
TARGET_GRID_STEPS = 8   # keep enough steps for pipelining / both v7x TCs
SINGLE_BLOCK_ROWS = 64  # below this, one full-size block (no row padding)


def _round_up(x, m):
    return ((x + m - 1) // m) * m


def _ts_kernel(coef_ref, bias_ref, pc_ref, out_ref):
    # coef_ref: SMEM (30,)  == coefficients.reshape(3, NUM_TERMS, 2).ravel()
    # bias_ref: SMEM (3,)
    # pc_ref:   VMEM (2, BR, 128)   -> [0] = x coords, [1] = y coords
    # out_ref:  VMEM (3, BR, 128)
    x = pc_ref[0]  # (BR, 128), dense over sublanes & lanes
    y = pc_ref[1]

    # Read all 33 scalars up front so the sreg->vreg broadcasts group together.
    c = [[(coef_ref[(col * NUM_TERMS + t) * 2 + 0],
           coef_ref[(col * NUM_TERMS + t) * 2 + 1])
          for t in range(NUM_TERMS)] for col in range(3)]
    b = [bias_ref[col] for col in range(3)]

    # t = 0 term: x**0 == y**0 == 1 (matches torch.pow incl. 0**0), so fold it
    # into the per-color bias as a pure scalar add.
    acc = [jnp.full(x.shape, b[col] + c[col][0][0] + c[col][0][1], x.dtype)
           for col in range(3)]

    # Shared power chain, hoisted out of the color loop (no per-term
    # broadcasts inside the unrolled loop).
    xp = x
    yp = y
    for t in range(1, NUM_TERMS):
        for col in range(3):
            acc[col] = acc[col] + c[col][t][0] * xp + c[col][t][1] * yp
        if t < NUM_TERMS - 1:
            xp = xp * x
            yp = yp * y

    for col in range(3):
        out_ref[col] = acc[col]


def ts_approximation(pix_coord, coefficients, bias):
    """pix_coord: (num_pixels, 2) -> output (3, num_pixels) float32."""
    num_pixels = pix_coord.shape[0]
    rows = pl.cdiv(num_pixels, LANE)

    # Adaptive tile selection (static, host-side Python on shapes).
    if rows <= SINGLE_BLOCK_ROWS:
        # Tiny input: single block equal to the full row extent -> zero
        # sublane-rounding waste (full-dim block dims are always legal).
        block_rows = rows
    else:
        rows8 = _round_up(rows, 8)
        block_rows = min(MAX_BLOCK_ROWS,
                         _round_up(pl.cdiv(rows8, TARGET_GRID_STEPS), 8))
    rows_padded = _round_up(rows, block_rows)
    padded_pixels = rows_padded * LANE

    # Host-side prep: transpose + pad + reshape to a sublane/lane-dense
    # (2, rows_padded, 128) slab.  NOTE: this is a real HBM materialization
    # (it cannot fuse into the Pallas custom call).
    pc_t = pix_coord.astype(jnp.float32).T                       # (2, P)
    if padded_pixels != num_pixels:
        pc_t = jnp.pad(pc_t, ((0, 0), (0, padded_pixels - num_pixels)))
    pc_3d = pc_t.reshape(2, rows_padded, LANE)

    coef_flat = coefficients.astype(jnp.float32).reshape(-1)     # (30,)
    bias_f = bias.astype(jnp.float32)                            # (3,)

    # ~54 VALU flops/pixel; 8 B/px in + 12 B/px out + scalars.
    cost = pl.CostEstimate(
        flops=54 * padded_pixels,
        transcendentals=0,
        bytes_accessed=20 * padded_pixels + (coef_flat.size + bias_f.size) * 4)

    out = pl.pallas_call(
        _ts_kernel,
        out_shape=jax.ShapeDtypeStruct((3, rows_padded, LANE), jnp.float32),
        grid=(rows_padded // block_rows,),
        in_specs=[
            pl.BlockSpec(memory_space=pltpu.SMEM),                      # coef
            pl.BlockSpec(memory_space=pltpu.SMEM),                      # bias
            pl.BlockSpec((2, block_rows, LANE), lambda i: (0, i, 0)),   # xy
        ],
        out_specs=pl.BlockSpec((3, block_rows, LANE), lambda i: (0, i, 0)),
        compiler_params=pltpu.CompilerParams(
            dimension_semantics=("parallel",)),
        cost_estimate=cost,
    )(coef_flat, bias_f, pc_3d)

    out_flat = out.reshape(3, padded_pixels)   # contiguous -> copy-free
    if padded_pixels == num_pixels:
        return out_flat                        # no epilogue slice / copy
    return out_flat[:, :num_pixels]


def _reference(pix_coord, coefficients, bias):
    # pure-JAX reference of the PyTorch double loop
    powers = jnp.arange(NUM_TERMS, dtype=jnp.float32)             # (T,)
    vand = pix_coord[:, None, :] ** powers[None, :, None]         # (P, T, 2)
    out = jnp.einsum('ctk,ptk->cp', coefficients, vand) + bias[:, None]
    return out.astype(jnp.float32)


if __name__ == "__main__":
    key = jax.random.PRNGKey(0)
    k_coef, k_pix1, k_pix2 = jax.random.split(key, 3)

    # xavier_uniform_ on (3, NUM_TERMS, 2): fan_in = 5*2 = 10, fan_out = 3*2 = 6
    bound = (6.0 / (10.0 + 6.0)) ** 0.5
    coefficients = jax.random.uniform(
        k_coef, (3, NUM_TERMS, 2), jnp.float32, minval=-bound, maxval=bound)
    bias = jnp.zeros((3,), jnp.float32)  # nn.init.zeros_

    ts_fn = jax.jit(ts_approximation)

    # Case 1: the module's small config, image_dim = (3, 16, 16) -> 256 pixels
    # (lane-aligned single-block path, no epilogue slice).
    num_pixels = 16 * 16
    pix_coord = jax.random.uniform(k_pix1, (num_pixels, 2), jnp.float32)
    out = jax.block_until_ready(ts_fn(pix_coord, coefficients, bias))
    ref = _reference(pix_coord, coefficients, bias)
    assert out.shape == (3, num_pixels)
    assert jnp.allclose(out, ref, atol=1e-5, rtol=1e-5), "mismatch (16x16)"

    # Case 2: 96x96 image -> 9216 pixels (multi-step grid + row padding path).
    num_pixels2 = 96 * 96
    pix_coord2 = jax.random.uniform(k_pix2, (num_pixels2, 2), jnp.float32)
    out2 = jax.block_until_ready(ts_fn(pix_coord2, coefficients, bias))
    ref2 = _reference(pix_coord2, coefficients, bias)
    assert out2.shape == (3, num_pixels2)
    assert jnp.allclose(out2, ref2, atol=1e-5, rtol=1e-5), "mismatch (96x96)"

    print("KERNEL_OK")
</pallas_src>

<mosaic_0001>
module attributes {stable_mosaic.version = 11 : i64} {
  func.func @_ts_kernel(%arg0: i32, %arg1: memref<30xf32, #tpu.memory_space<smem>>, %arg2: memref<3xf32, #tpu.memory_space<smem>>, %arg3: memref<2x2x128xf32, #tpu.memory_space<vmem>>, %arg4: memref<3x2x128xf32, #tpu.memory_space<vmem>>) attributes {dimension_semantics = [#tpu.dimension_semantics<parallel>], iteration_bounds = array<i64: 1>, scalar_prefetch = 0 : i64, scratch_operands = 0 : i64, tpu.core_type = #tpu.core_type<tc>, window_params = [{transform_indices = @transform_0, window_bounds = array<i64: 30>}, {transform_indices = @transform_1, window_bounds = array<i64: 3>}, {transform_indices = @transform_2, window_bounds = array<i64: 2, 2, 128>}, {transform_indices = @transform_3, window_bounds = array<i64: 3, 2, 128>}]} {
    %c0 = arith.constant 0 : index
    %c0_0 = arith.constant 0 : index
    %c0_1 = arith.constant 0 : index
    %0 = vector.load %arg3[%c0, %c0_0, %c0_1] : memref<2x2x128xf32, #tpu.memory_space<vmem>>, vector<1x2x128xf32>
    %1 = vector.shape_cast %0 : vector<1x2x128xf32> to vector<2x128xf32>
    %c1 = arith.constant 1 : index
    %c0_2 = arith.constant 0 : index
    %c0_3 = arith.constant 0 : index
    %2 = vector.load %arg3[%c1, %c0_2, %c0_3] : memref<2x2x128xf32, #tpu.memory_space<vmem>>, vector<1x2x128xf32>
    %3 = vector.shape_cast %2 : vector<1x2x128xf32> to vector<2x128xf32>
    %c0_4 = arith.constant 0 : index
    %4 = memref.load %arg1[%c0_4] : memref<30xf32, #tpu.memory_space<smem>>
    %c1_5 = arith.constant 1 : index
    %5 = memref.load %arg1[%c1_5] : memref<30xf32, #tpu.memory_space<smem>>
    %c2 = arith.constant 2 : index
    %6 = memref.load %arg1[%c2] : memref<30xf32, #tpu.memory_space<smem>>
    %c3 = arith.constant 3 : index
    %7 = memref.load %arg1[%c3] : memref<30xf32, #tpu.memory_space<smem>>
    %c4 = arith.constant 4 : index
    %8 = memref.load %arg1[%c4] : memref<30xf32, #tpu.memory_space<smem>>
    %c5 = arith.constant 5 : index
    %9 = memref.load %arg1[%c5] : memref<30xf32, #tpu.memory_space<smem>>
    %c6 = arith.constant 6 : index
    %10 = memref.load %arg1[%c6] : memref<30xf32, #tpu.memory_space<smem>>
    %c7 = arith.constant 7 : index
    %11 = memref.load %arg1[%c7] : memref<30xf32, #tpu.memory_space<smem>>
    %c8 = arith.constant 8 : index
    %12 = memref.load %arg1[%c8] : memref<30xf32, #tpu.memory_space<smem>>
    %c9 = arith.constant 9 : index
    %13 = memref.load %arg1[%c9] : memref<30xf32, #tpu.memory_space<smem>>
    %c10 = arith.constant 10 : index
    %14 = memref.load %arg1[%c10] : memref<30xf32, #tpu.memory_space<smem>>
    %c11 = arith.constant 11 : index
    %15 = memref.load %arg1[%c11] : memref<30xf32, #tpu.memory_space<smem>>
    %c12 = arith.constant 12 : index
    %16 = memref.load %arg1[%c12] : memref<30xf32, #tpu.memory_space<smem>>
    %c13 = arith.constant 13 : index
    %17 = memref.load %arg1[%c13] : memref<30xf32, #tpu.memory_space<smem>>
    %c14 = arith.constant 14 : index
    %18 = memref.load %arg1[%c14] : memref<30xf32, #tpu.memory_space<smem>>
    %c15 = arith.constant 15 : index
    %19 = memref.load %arg1[%c15] : memref<30xf32, #tpu.memory_space<smem>>
    %c16 = arith.constant 16 : index
    %20 = memref.load %arg1[%c16] : memref<30xf32, #tpu.memory_space<smem>>
    %c17 = arith.constant 17 : index
    %21 = memref.load %arg1[%c17] : memref<30xf32, #tpu.memory_space<smem>>
    %c18 = arith.constant 18 : index
    %22 = memref.load %arg1[%c18] : memref<30xf32, #tpu.memory_space<smem>>
    %c19 = arith.constant 19 : index
    %23 = memref.load %arg1[%c19] : memref<30xf32, #tpu.memory_space<smem>>
    %c20 = arith.constant 20 : index
    %24 = memref.load %arg1[%c20] : memref<30xf32, #tpu.memory_space<smem>>
    %c21 = arith.constant 21 : index
    %25 = memref.load %arg1[%c21] : memref<30xf32, #tpu.memory_space<smem>>
    %c22 = arith.constant 22 : index
    %26 = memref.load %arg1[%c22] : memref<30xf32, #tpu.memory_space<smem>>
    %c23 = arith.constant 23 : index
    %27 = memref.load %arg1[%c23] : memref<30xf32, #tpu.memory_space<smem>>
    %c24 = arith.constant 24 : index
    %28 = memref.load %arg1[%c24] : memref<30xf32, #tpu.memory_space<smem>>
    %c25 = arith.constant 25 : index
    %29 = memref.load %arg1[%c25] : memref<30xf32, #tpu.memory_space<smem>>
    %c26 = arith.constant 26 : index
    %30 = memref.load %arg1[%c26] : memref<30xf32, #tpu.memory_space<smem>>
    %c27 = arith.constant 27 : index
    %31 = memref.load %arg1[%c27] : memref<30xf32, #tpu.memory_space<smem>>
    %c28 = arith.constant 28 : index
    %32 = memref.load %arg1[%c28] : memref<30xf32, #tpu.memory_space<smem>>
    %c29 = arith.constant 29 : index
    %33 = memref.load %arg1[%c29] : memref<30xf32, #tpu.memory_space<smem>>
    %c0_6 = arith.constant 0 : index
    %34 = memref.load %arg2[%c0_6] : memref<3xf32, #tpu.memory_space<smem>>
    %c1_7 = arith.constant 1 : index
    %35 = memref.load %arg2[%c1_7] : memref<3xf32, #tpu.memory_space<smem>>
    %c2_8 = arith.constant 2 : index
    %36 = memref.load %arg2[%c2_8] : memref<3xf32, #tpu.memory_space<smem>>
    %37 = arith.addf %34, %4 : f32
    %38 = arith.addf %37, %5 : f32
    %39 = vector.broadcast %38 : f32 to vector<2x128xf32>
    %40 = arith.addf %35, %14 : f32
    %41 = arith.addf %40, %15 : f32
    %42 = vector.broadcast %41 : f32 to vector<2x128xf32>
    %43 = arith.addf %36, %24 : f32
    %44 = arith.addf %43, %25 : f32
    %45 = vector.broadcast %44 : f32 to vector<2x128xf32>
    %46 = vector.broadcast %6 : f32 to vector<2x128xf32>
    %47 = arith.mulf %46, %1 : vector<2x128xf32>
    %48 = arith.addf %39, %47 : vector<2x128xf32>
    %49 = vector.broadcast %7 : f32 to vector<2x128xf32>
    %50 = arith.mulf %49, %3 : vector<2x128xf32>
    %51 = arith.addf %48, %50 : vector<2x128xf32>
    %52 = vector.broadcast %16 : f32 to vector<2x128xf32>
    %53 = arith.mulf %52, %1 : vector<2x128xf32>
    %54 = arith.addf %42, %53 : vector<2x128xf32>
    %55 = vector.broadcast %17 : f32 to vector<2x128xf32>
    %56 = arith.mulf %55, %3 : vector<2x128xf32>
    %57 = arith.addf %54, %56 : vector<2x128xf32>
    %58 = vector.broadcast %26 : f32 to vector<2x128xf32>
    %59 = arith.mulf %58, %1 : vector<2x128xf32>
    %60 = arith.addf %45, %59 : vector<2x128xf32>
    %61 = vector.broadcast %27 : f32 to vector<2x128xf32>
    %62 = arith.mulf %61, %3 : vector<2x128xf32>
    %63 = arith.addf %60, %62 : vector<2x128xf32>
    %64 = arith.mulf %1, %1 : vector<2x128xf32>
    %65 = arith.mulf %3, %3 : vector<2x128xf32>
    %66 = vector.broadcast %8 : f32 to vector<2x128xf32>
    %67 = arith.mulf %66, %64 : vector<2x128xf32>
    %68 = arith.addf %51, %67 : vector<2x128xf32>
    %69 = vector.broadcast %9 : f32 to vector<2x128xf32>
    %70 = arith.mulf %69, %65 : vector<2x128xf32>
    %71 = arith.addf %68, %70 : vector<2x128xf32>
    %72 = vector.broadcast %18 : f32 to vector<2x128xf32>
    %73 = arith.mulf %72, %64 : vector<2x128xf32>
    %74 = arith.addf %57, %73 : vector<2x128xf32>
    %75 = vector.broadcast %19 : f32 to vector<2x128xf32>
    %76 = arith.mulf %75, %65 : vector<2x128xf32>
    %77 = arith.addf %74, %76 : vector<2x128xf32>
    %78 = vector.broadcast %28 : f32 to vector<2x128xf32>
    %79 = arith.mulf %78, %64 : vector<2x128xf32>
    %80 = arith.addf %63, %79 : vector<2x128xf32>
    %81 = vector.broadcast %29 : f32 to vector<2x128xf32>
    %82 = arith.mulf %81, %65 : vector<2x128xf32>
    %83 = arith.addf %80, %82 : vector<2x128xf32>
    %84 = arith.mulf %64, %1 : vector<2x128xf32>
    %85 = arith.mulf %65, %3 : vector<2x128xf32>
    %86 = vector.broadcast %10 : f32 to vector<2x128xf32>
    %87 = arith.mulf %86, %84 : vector<2x128xf32>
    %88 = arith.addf %71, %87 : vector<2x128xf32>
    %89 = vector.broadcast %11 : f32 to vector<2x128xf32>
    %90 = arith.mulf %89, %85 : vector<2x128xf32>
    %91 = arith.addf %88, %90 : vector<2x128xf32>
    %92 = vector.broadcast %20 : f32 to vector<2x128xf32>
    %93 = arith.mulf %92, %84 : vector<2x128xf32>
    %94 = arith.addf %77, %93 : vector<2x128xf32>
    %95 = vector.broadcast %21 : f32 to vector<2x128xf32>
    %96 = arith.mulf %95, %85 : vector<2x128xf32>
    %97 = arith.addf %94, %96 : vector<2x128xf32>
    %98 = vector.broadcast %30 : f32 to vector<2x128xf32>
    %99 = arith.mulf %98, %84 : vector<2x128xf32>
    %100 = arith.addf %83, %99 : vector<2x128xf32>
    %101 = vector.broadcast %31 : f32 to vector<2x128xf32>
    %102 = arith.mulf %101, %85 : vector<2x128xf32>
    %103 = arith.addf %100, %102 : vector<2x128xf32>
    %104 = arith.mulf %84, %1 : vector<2x128xf32>
    %105 = arith.mulf %85, %3 : vector<2x128xf32>
    %106 = vector.broadcast %12 : f32 to vector<2x128xf32>
    %107 = arith.mulf %106, %104 : vector<2x128xf32>
    %108 = arith.addf %91, %107 : vector<2x128xf32>
    %109 = vector.broadcast %13 : f32 to vector<2x128xf32>
    %110 = arith.mulf %109, %105 : vector<2x128xf32>
    %111 = arith.addf %108, %110 : vector<2x128xf32>
    %112 = vector.broadcast %22 : f32 to vector<2x128xf32>
    %113 = arith.mulf %112, %104 : vector<2x128xf32>
    %114 = arith.addf %97, %113 : vector<2x128xf32>
    %115 = vector.broadcast %23 : f32 to vector<2x128xf32>
    %116 = arith.mulf %115, %105 : vector<2x128xf32>
    %117 = arith.addf %114, %116 : vector<2x128xf32>
    %118 = vector.broadcast %32 : f32 to vector<2x128xf32>
    %119 = arith.mulf %118, %104 : vector<2x128xf32>
    %120 = arith.addf %103, %119 : vector<2x128xf32>
    %121 = vector.broadcast %33 : f32 to vector<2x128xf32>
    %122 = arith.mulf %121, %105 : vector<2x128xf32>
    %123 = arith.addf %120, %122 : vector<2x128xf32>
    %c0_9 = arith.constant 0 : index
    %c0_10 = arith.constant 0 : index
    %c0_11 = arith.constant 0 : index
    %124 = vector.load %arg4[%c0_9, %c0_10, %c0_11] : memref<3x2x128xf32, #tpu.memory_space<vmem>>, vector<1x2x128xf32>
    %125 = vector.shape_cast %124 : vector<1x2x128xf32> to vector<2x128xf32>
    %126 = vector.shape_cast %111 : vector<2x128xf32> to vector<1x2x128xf32>
    tpu.vector_store %arg4[%c0_9, %c0_10, %c0_11], %126 {strides = array<i32>} : memref<3x2x128xf32, #tpu.memory_space<vmem>>, vector<1x2x128xf32>,
    %c1_12 = arith.constant 1 : index
    %c0_13 = arith.constant 0 : index
    %c0_14 = arith.constant 0 : index
    %127 = vector.load %arg4[%c1_12, %c0_13, %c0_14] : memref<3x2x128xf32, #tpu.memory_space<vmem>>, vector<1x2x128xf32>
    %128 = vector.shape_cast %127 : vector<1x2x128xf32> to vector<2x128xf32>
    %129 = vector.shape_cast %117 : vector<2x128xf32> to vector<1x2x128xf32>
    tpu.vector_store %arg4[%c1_12, %c0_13, %c0_14], %129 {strides = array<i32>} : memref<3x2x128xf32, #tpu.memory_space<vmem>>, vector<1x2x128xf32>,
    %c2_15 = arith.constant 2 : index
    %c0_16 = arith.constant 0 : index
    %c0_17 = arith.constant 0 : index
    %130 = vector.load %arg4[%c2_15, %c0_16, %c0_17] : memref<3x2x128xf32, #tpu.memory_space<vmem>>, vector<1x2x128xf32>
    %131 = vector.shape_cast %130 : vector<1x2x128xf32> to vector<2x128xf32>
    %132 = vector.shape_cast %123 : vector<2x128xf32> to vector<1x2x128xf32>
    tpu.vector_store %arg4[%c2_15, %c0_16, %c0_17], %132 {strides = array<i32>} : memref<3x2x128xf32, #tpu.memory_space<vmem>>, vector<1x2x128xf32>,
    return
  }
  func.func @transform_0(%arg0: i32) -> i32 {
    %c0_i32 = arith.constant 0 : i32
    %c0_i32_0 = arith.constant 0 : i32
    return %c0_i32 : i32
  }
  func.func @transform_1(%arg0: i32) -> i32 {
    %c0_i32 = arith.constant 0 : i32
    %c0_i32_0 = arith.constant 0 : i32
    return %c0_i32 : i32
  }
  func.func @transform_2(%arg0: i32) -> (i32, i32, i32) {
    %c0_i32 = arith.constant 0 : i32
    %c0_i32_0 = arith.constant 0 : i32
    %c0_i32_1 = arith.constant 0 : i32
    return %c0_i32, %arg0, %c0_i32_0 : i32, i32, i32
  }
  func.func @transform_3(%arg0: i32) -> (i32, i32, i32) {
    %c0_i32 = arith.constant 0 : i32
    %c0_i32_0 = arith.constant 0 : i32
    %c0_i32_1 = arith.constant 0 : i32
    return %c0_i32, %arg0, %c0_i32_0 : i32, i32, i32
  }
}

</mosaic_0001>

<llo_original>
// kernel: ts_approximation.1
$region0: #{ts_approximation.1}
  #allocation0 [shape = 'u32[]', space=smem, size = 0x4, offset = 0x4, fixed_abs, tag = 'smem constant byte address 0x4 - core index']
  #allocation1 [shape = 'u32[144,128]{1,0:T(1,128)}', space=vmem, size = 0x12000, scoped, tag = 'internal scratch']
  %s0 = inlined_call_operand.vmem [shape: f32[30], index: 0, kind: input, shape index: {}]
  %s1 = inlined_call_operand.vmem [shape: f32[3], index: 1, kind: input, shape index: {}]
  %s2 = inlined_call_operand.vmem [shape: f32[2,2,128], index: 2, kind: input, shape index: {}]
  %s3 = inlined_call_operand.vmem [shape: f32[3,2,128], index: 3, kind: output, shape index: {}]
  %s4 = sld [smem:[#allocation0]]
  $region30: #{ts_approximation.1} parent=0
    _
  %s6 = ssub.s32 1, %s4
  %s7 = scalar_select 0, %s6, %s4
  $region1: #{ts_approximation.1} parent=0
    #allocation2 [shape = 'u8[512]{0}', space=smem, size = 0x200, scoped, tag = 'input window, operand 0, single buffered']
    #allocation3 [shape = 's32[1]{0}', space=sflag, size = 0x4, scoped, tag = 'scoped memory for ts_approximation.1']
    #allocation4 [shape = 'u8[512]{0}', space=smem, size = 0x200, scoped, tag = 'input window, operand 1, single buffered']
    #allocation5 [shape = 's32[1]{0}', space=sflag, size = 0x4, scoped, tag = 'scoped memory for ts_approximation.1']
    %8 = vsyncpa [#allocation3], 0
    %9 = vsyncpa [#allocation5], 0
    // Predicated region
    $region2: #{ts_approximation.1} parent=1 // pred_check
      _
    $region3: #{ts_approximation.1} parent=1 // pred_check_branch
      %11 = sbr.rel (0) target = $region5
    $region4: #{ts_approximation.1} parent=1 // pred_region
      %s13 = ssub.s32 16, 16
      %14 = vsyncadd [#allocation3], %s13
      %s16 = sshll.u32 %s0, 4
      %s17 = int_to_ptr.vmem [resolvable:$true] %s16
      %19 = dma.vmem_to_smem %s17, 16, [#allocation2], [#allocation3]
    $region5: #{ts_approximation.1} parent=1 // pred_fallthru
      _
    // Predicated region
    $region6: #{ts_approximation.1} parent=1 // pred_check
      _
    $region7: #{ts_approximation.1} parent=1 // pred_check_branch
      %21 = sbr.rel (0) target = $region9
    $region8: #{ts_approximation.1} parent=1 // pred_region
      %s23 = ssub.s32 16, 16
      %24 = vsyncadd [#allocation5], %s23
      %s26 = sshll.u32 %s1, 4
      %s27 = int_to_ptr.vmem [resolvable:$true] %s26
      %29 = dma.vmem_to_smem %s27, 16, [#allocation4], [#allocation5]
    $region9: #{ts_approximation.1} parent=1 // pred_fallthru
      _
    // Predicated region
    $region10: #{ts_approximation.1} parent=1 // pred_check
      _
    $region11: #{ts_approximation.1} parent=1 // pred_check_branch
      %31 = sbr.rel (0) target = $region13
    $region12: #{ts_approximation.1} parent=1 // pred_region
      _
    $region13: #{ts_approximation.1} parent=1 // pred_fallthru
      _
    // Predicated region
    $region14: #{ts_approximation.1} parent=1 // pred_check
      _
    $region15: #{ts_approximation.1} parent=1 // pred_check_branch
      %33 = sbr.rel (0) target = $region17
    $region16: #{ts_approximation.1} parent=1 // pred_region
      %34 = dma.done [#allocation3], 16
    $region17: #{ts_approximation.1} parent=1 // pred_fallthru
      _
    // Predicated region
    $region18: #{ts_approximation.1} parent=1 // pred_check
      _
    $region19: #{ts_approximation.1} parent=1 // pred_check_branch
      %36 = sbr.rel (0) target = $region21
    $region20: #{ts_approximation.1} parent=1 // pred_region
      %37 = dma.done [#allocation5], 16
    $region21: #{ts_approximation.1} parent=1 // pred_fallthru
      _
    %38 = sfence
    %v39 = vld [vmem:[%s2] sm:$0x3]
    %s40 = scalar_lea.vmem %s2, 2
    %v41 = vld [vmem:[%s40] sm:$0x3]
    %s42 = sld [smem:[#allocation2]]
    %s43 = sld [smem:[#allocation2 + $0x1]]
    %s44 = sld [smem:[#allocation2 + $0x2]]
    %s45 = sld [smem:[#allocation2 + $0x3]]
    %s46 = sld [smem:[#allocation2 + $0x4]]
    %s47 = sld [smem:[#allocation2 + $0x5]]
    %s48 = sld [smem:[#allocation2 + $0x6]]
    %s49 = sld [smem:[#allocation2 + $0x7]]
    %s50 = sld [smem:[#allocation2 + $0x8]]
    %s51 = sld [smem:[#allocation2 + $0x9]]
    %s52 = sld [smem:[#allocation2 + $0xa]]
    %s53 = sld [smem:[#allocation2 + $0xb]]
    %s54 = sld [smem:[#allocation2 + $0xc]]
    %s55 = sld [smem:[#allocation2 + $0xd]]
    %s56 = sld [smem:[#allocation2 + $0xe]]
    %s57 = sld [smem:[#allocation2 + $0xf]]
    %s58 = sld [smem:[#allocation2 + $0x10]]
    %s59 = sld [smem:[#allocation2 + $0x11]]
    %s60 = sld [smem:[#allocation2 + $0x12]]
    %s61 = sld [smem:[#allocation2 + $0x13]]
    %s62 = sld [smem:[#allocation2 + $0x14]]
    %s63 = sld [smem:[#allocation2 + $0x15]]
    %s64 = sld [smem:[#allocation2 + $0x16]]
    %s65 = sld [smem:[#allocation2 + $0x17]]
    %s66 = sld [smem:[#allocation2 + $0x18]]
    %s67 = sld [smem:[#allocation2 + $0x19]]
    %s68 = sld [smem:[#allocation2 + $0x1a]]
    %s69 = sld [smem:[#allocation2 + $0x1b]]
    %s70 = sld [smem:[#allocation2 + $0x1c]]
    %s71 = sld [smem:[#allocation2 + $0x1d]]
    %s72 = sld [smem:[#allocation4]]
    %s73 = sld [smem:[#allocation4 + $0x1]]
    %s74 = sld [smem:[#allocation4 + $0x2]]
    %s75 = sadd.f32 %s72, %s42
    %s76 = sadd.f32 %s75, %s43
    %v77 = vstv %s76
    %s78 = sadd.f32 %s73, %s52
    %s79 = sadd.f32 %s78, %s53
    %v80 = vstv %s79
    %s81 = sadd.f32 %s74, %s62
    %s82 = sadd.f32 %s81, %s63
    %v83 = vstv %s82
    %v84 = vstv %s44
    %v85 = vmul.f32 %v84, %v39
    %v86 = vadd.f32 %v77, %v85
    %v87 = vstv %s45
    %v88 = vmul.f32 %v87, %v41
    %v89 = vadd.f32 %v86, %v88
    %v90 = vstv %s54
    %v91 = vmul.f32 %v90, %v39
    %v92 = vadd.f32 %v80, %v91
    %v93 = vstv %s55
    %v94 = vmul.f32 %v93, %v41
    %v95 = vadd.f32 %v92, %v94
    %v96 = vstv %s64
    %v97 = vmul.f32 %v96, %v39
    %v98 = vadd.f32 %v83, %v97
    %v99 = vstv %s65
    %v100 = vmul.f32 %v99, %v41
    %v101 = vadd.f32 %v98, %v100
    %v102 = vmul.f32 %v39, %v39
    %v103 = vmul.f32 %v41, %v41
    %v104 = vstv %s46
    %v105 = vmul.f32 %v104, %v102
    %v106 = vadd.f32 %v89, %v105
    %v107 = vstv %s47
    %v108 = vmul.f32 %v107, %v103
    %v109 = vadd.f32 %v106, %v108
    %v110 = vstv %s56
    %v111 = vmul.f32 %v110, %v102
    %v112 = vadd.f32 %v95, %v111
    %v113 = vstv %s57
    %v114 = vmul.f32 %v113, %v103
    %v115 = vadd.f32 %v112, %v114
    %v116 = vstv %s66
    %v117 = vmul.f32 %v116, %v102
    %v118 = vadd.f32 %v101, %v117
    %v119 = vstv %s67
    %v120 = vmul.f32 %v119, %v103
    %v121 = vadd.f32 %v118, %v120
    %v122 = vmul.f32 %v102, %v39
    %v123 = vmul.f32 %v103, %v41
    %v124 = vstv %s48
    %v125 = vmul.f32 %v124, %v122
    %v126 = vadd.f32 %v109, %v125
    %v127 = vstv %s49
    %v128 = vmul.f32 %v127, %v123
    %v129 = vadd.f32 %v126, %v128
    %v130 = vstv %s58
    %v131 = vmul.f32 %v130, %v122
    %v132 = vadd.f32 %v115, %v131
    %v133 = vstv %s59
    %v134 = vmul.f32 %v133, %v123
    %v135 = vadd.f32 %v132, %v134
    %v136 = vstv %s68
    %v137 = vmul.f32 %v136, %v122
    %v138 = vadd.f32 %v121, %v137
    %v139 = vstv %s69
    %v140 = vmul.f32 %v139, %v123
    %v141 = vadd.f32 %v138, %v140
    %v142 = vmul.f32 %v122, %v39
    %v143 = vmul.f32 %v123, %v41
    %v144 = vstv %s50
    %v145 = vmul.f32 %v144, %v142
    %v146 = vadd.f32 %v129, %v145
    %v147 = vstv %s51
    %v148 = vmul.f32 %v147, %v143
    %v149 = vadd.f32 %v146, %v148
    %v150 = vstv %s60
    %v151 = vmul.f32 %v150, %v142
    %v152 = vadd.f32 %v135, %v151
    %v153 = vstv %s61
    %v154 = vmul.f32 %v153, %v143
    %v155 = vadd.f32 %v152, %v154
    %v156 = vstv %s70
    %v157 = vmul.f32 %v156, %v142
    %v158 = vadd.f32 %v141, %v157
    %v159 = vstv %s71
    %v160 = vmul.f32 %v159, %v143
    %v161 = vadd.f32 %v158, %v160
    %162 = vst [vmem:[%s3] sm:$0x3] %v149
    %s163 = scalar_lea.vmem %s3, 2
    %164 = vst [vmem:[%s163] sm:$0x3] %v155
    %s165 = scalar_lea.vmem %s3, 4
    %166 = vst [vmem:[%s165] sm:$0x3] %v161
    // Predicated region
    $region22: #{ts_approximation.1} parent=1 // pred_check
      _
    $region23: #{ts_approximation.1} parent=1 // pred_check_branch
      %168 = sbr.rel (0) target = $region25
    $region24: #{ts_approximation.1} parent=1 // pred_region
      _
    $region25: #{ts_approximation.1} parent=1 // pred_fallthru
      _
    // Predicated region
    $region26: #{ts_approximation.1} parent=1 // pred_check
      _
    $region27: #{ts_approximation.1} parent=1 // pred_check_branch
      %170 = sbr.rel (0) target = $region29
    $region28: #{ts_approximation.1} parent=1 // pred_region
      _
    $region29: #{ts_approximation.1} parent=1 // pred_fallthru
      _
    %171 = vsyncpa [#allocation3], 1
    %172 = vsyncpa [#allocation5], 1

</llo_original>
